<compile_context>
chip_gen: v6e
topology: v6e:2x2x1
jax: 0.10.0
libtpu: 0.0.40
codegen_flags: <defaults>
</compile_context>

<pallas_src>
import jax
import jax.numpy as jnp
from jax.experimental import pallas as pl
from jax.experimental.pallas import tpu as pltpu


def mlp_kernel(w1_ref, b1_ref, w2_ref, b2_ref, xt_ref, o_ref):
    # xt_ref: (6, ts, 128) f32 in VMEM   (features major, batch on sublanes+lanes)
    # w1_ref: (6, 3), b1_ref: (3,), w2_ref: (3, 1), b2_ref: (1,)  -- SMEM scalars
    # o_ref : (ts, 128) f32 in VMEM
    x = xt_ref[...]                                            # (6, ts, 128)

    # Output accumulator starts at the fc2 bias (scalar splat, full vregs).
    y = jnp.full(o_ref.shape, b2_ref[0], dtype=jnp.float32)    # (ts, 128)

    # fc1 + ReLU + fc2, fully unrolled scalar-broadcast FMAs on the VPU.
    for j in range(3):                                         # hidden units
        h = jnp.full(o_ref.shape, b1_ref[j], dtype=jnp.float32)
        for k in range(6):                                     # input features
            h = h + w1_ref[k, j] * x[k]                        # scalar * (ts,128)
        h = jnp.maximum(h, 0.0)                                # ReLU
        y = y + w2_ref[j, 0] * h                               # fc2 FMA

    o_ref[...] = y


def _round_up(a, b):
    return ((a + b - 1) // b) * b


def mlp_forward(x, w1, b1, w2, b2, *, block_s=1024):
    """x: (B, 6) f32 -> (B, 1) f32, matching Linear(6,3)->ReLU->Linear(3,1).

    block_s is the number of 128-wide batch rows per grid step
    (ts = block_s -> 131072 batch elements, ~3 MiB of input per buffer).
    """
    B, F = x.shape

    # Batch laid out as S rows of 128 lanes; S rounded to a sublane multiple (8).
    S = _round_up(B, 128) // 128
    S_ru = _round_up(S, 8)
    ts = min(block_s, S_ru)
    # Keep >=2 grid steps when free, so ("parallel",) feeds both v7x TensorCores.
    if ts == S_ru and S_ru % 16 == 0:
        ts = S_ru // 2
    S_pad = _round_up(S_ru, ts)
    b_pad = S_pad * 128

    # Single fused transpose+pad, then a free reshape to (6, S_pad, 128).
    xt = jnp.pad(x.T, ((0, 0), (0, b_pad - B))).reshape(F, S_pad, 128)

    grid = (S_pad // ts,)
    y = pl.pallas_call(
        mlp_kernel,
        out_shape=jax.ShapeDtypeStruct((S_pad, 128), jnp.float32),
        grid_spec=pltpu.PrefetchScalarGridSpec(
            num_scalar_prefetch=0,
            grid=grid,
            in_specs=[
                # Tiny weights/biases live in SMEM, resident across grid steps.
                pl.BlockSpec(memory_space=pltpu.MemorySpace.SMEM),  # w1 (6, 3)
                pl.BlockSpec(memory_space=pltpu.MemorySpace.SMEM),  # b1 (3,)
                pl.BlockSpec(memory_space=pltpu.MemorySpace.SMEM),  # w2 (3, 1)
                pl.BlockSpec(memory_space=pltpu.MemorySpace.SMEM),  # b2 (1,)
                # Activations: (6, ts, 128) blocks, batch tiled on sublanes+lanes.
                pl.BlockSpec((F, ts, 128), lambda i: (0, i, 0)),
            ],
            out_specs=pl.BlockSpec((ts, 128), lambda i: (i, 0)),
        ),
        compiler_params=pltpu.CompilerParams(
            dimension_semantics=("parallel",),   # megacore sharding on v7x
        ),
    )(w1, b1, w2, b2, xt)

    # Padded batch positions hold b2 + sum_j w2_j*relu(b1_j); slice them off.
    return y.reshape(b_pad)[:B].reshape(B, 1)


def init_params(key):
    # Deterministic init mirroring nn.Linear's uniform(-1/sqrt(fan_in), 1/sqrt(fan_in)).
    k1, k2, k3, k4 = jax.random.split(key, 4)
    bound1 = 1.0 / jnp.sqrt(6.0)
    bound2 = 1.0 / jnp.sqrt(3.0)
    w1 = jax.random.uniform(k1, (6, 3), jnp.float32, -bound1, bound1)
    b1 = jax.random.uniform(k2, (3,), jnp.float32, -bound1, bound1)
    w2 = jax.random.uniform(k3, (3, 1), jnp.float32, -bound2, bound2)
    b2 = jax.random.uniform(k4, (1,), jnp.float32, -bound2, bound2)
    return w1, b1, w2, b2


if __name__ == "__main__":
    key = jax.random.PRNGKey(0)
    kx, kp = jax.random.split(key)

    # Small, non-multiple-of-128 batch to exercise tiling + padding paths.
    batch = 300
    x = jax.random.normal(kx, (batch, 6), jnp.float32)
    w1, b1, w2, b2 = init_params(kp)

    out = mlp_forward(x, w1, b1, w2, b2)
    out = jax.block_until_ready(out)

    # Reference check in plain JAX.
    ref = jnp.maximum(x @ w1 + b1[None, :], 0.0) @ w2 + b2[None, :]
    assert out.shape == (batch, 1)
    assert jnp.allclose(out, ref, atol=1e-5), "mismatch vs reference"

    # TODO(synk): for tiny deployment batches (~8) a standalone pallas_call is
    # dominated by dispatch overhead; let XLA fuse the MLP instead.
    print("KERNEL_OK")
</pallas_src>

<mosaic_0001>
module attributes {stable_mosaic.version = 11 : i64} {
  func.func @mlp_kernel(%arg0: i32, %arg1: memref<6x3xf32, #tpu.memory_space<smem>>, %arg2: memref<3xf32, #tpu.memory_space<smem>>, %arg3: memref<3x1xf32, #tpu.memory_space<smem>>, %arg4: memref<1xf32, #tpu.memory_space<smem>>, %arg5: memref<6x8x128xf32, #tpu.memory_space<vmem>>, %arg6: memref<8x128xf32, #tpu.memory_space<vmem>>) attributes {dimension_semantics = [#tpu.dimension_semantics<parallel>], iteration_bounds = array<i64: 1>, scalar_prefetch = 0 : i64, scratch_operands = 0 : i64, tpu.core_type = #tpu.core_type<tc>, window_params = [{transform_indices = @transform_0, window_bounds = array<i64: 6, 3>}, {transform_indices = @transform_1, window_bounds = array<i64: 3>}, {transform_indices = @transform_2, window_bounds = array<i64: 3, 1>}, {transform_indices = @transform_3, window_bounds = array<i64: 1>}, {transform_indices = @transform_4, window_bounds = array<i64: 6, 8, 128>}, {transform_indices = @transform_5, window_bounds = array<i64: 8, 128>}]} {
    %c0 = arith.constant 0 : index
    %c0_0 = arith.constant 0 : index
    %c0_1 = arith.constant 0 : index
    %0 = vector.load %arg5[%c0, %c0_0, %c0_1] : memref<6x8x128xf32, #tpu.memory_space<vmem>>, vector<6x8x128xf32>
    %c0_2 = arith.constant 0 : index
    %1 = memref.load %arg4[%c0_2] : memref<1xf32, #tpu.memory_space<smem>>
    %2 = vector.broadcast %1 : f32 to vector<8x128xf32>
    %c0_3 = arith.constant 0 : index
    %3 = memref.load %arg2[%c0_3] : memref<3xf32, #tpu.memory_space<smem>>
    %4 = vector.broadcast %3 : f32 to vector<8x128xf32>
    %c0_4 = arith.constant 0 : index
    %c0_5 = arith.constant 0 : index
    %5 = memref.load %arg1[%c0_4, %c0_5] : memref<6x3xf32, #tpu.memory_space<smem>>
    %6 = vector.extract_strided_slice %0 {offsets = [0, 0, 0], sizes = [1, 8, 128], strides = [1, 1, 1]} : vector<6x8x128xf32> to vector<1x8x128xf32>
    %7 = vector.shape_cast %6 : vector<1x8x128xf32> to vector<8x128xf32>
    %8 = vector.broadcast %5 : f32 to vector<8x128xf32>
    %9 = arith.mulf %8, %7 : vector<8x128xf32>
    %10 = arith.addf %4, %9 : vector<8x128xf32>
    %c1 = arith.constant 1 : index
    %c0_6 = arith.constant 0 : index
    %11 = memref.load %arg1[%c1, %c0_6] : memref<6x3xf32, #tpu.memory_space<smem>>
    %12 = vector.extract_strided_slice %0 {offsets = [1, 0, 0], sizes = [1, 8, 128], strides = [1, 1, 1]} : vector<6x8x128xf32> to vector<1x8x128xf32>
    %13 = vector.shape_cast %12 : vector<1x8x128xf32> to vector<8x128xf32>
    %14 = vector.broadcast %11 : f32 to vector<8x128xf32>
    %15 = arith.mulf %14, %13 : vector<8x128xf32>
    %16 = arith.addf %10, %15 : vector<8x128xf32>
    %c2 = arith.constant 2 : index
    %c0_7 = arith.constant 0 : index
    %17 = memref.load %arg1[%c2, %c0_7] : memref<6x3xf32, #tpu.memory_space<smem>>
    %18 = vector.extract_strided_slice %0 {offsets = [2, 0, 0], sizes = [1, 8, 128], strides = [1, 1, 1]} : vector<6x8x128xf32> to vector<1x8x128xf32>
    %19 = vector.shape_cast %18 : vector<1x8x128xf32> to vector<8x128xf32>
    %20 = vector.broadcast %17 : f32 to vector<8x128xf32>
    %21 = arith.mulf %20, %19 : vector<8x128xf32>
    %22 = arith.addf %16, %21 : vector<8x128xf32>
    %c3 = arith.constant 3 : index
    %c0_8 = arith.constant 0 : index
    %23 = memref.load %arg1[%c3, %c0_8] : memref<6x3xf32, #tpu.memory_space<smem>>
    %24 = vector.extract_strided_slice %0 {offsets = [3, 0, 0], sizes = [1, 8, 128], strides = [1, 1, 1]} : vector<6x8x128xf32> to vector<1x8x128xf32>
    %25 = vector.shape_cast %24 : vector<1x8x128xf32> to vector<8x128xf32>
    %26 = vector.broadcast %23 : f32 to vector<8x128xf32>
    %27 = arith.mulf %26, %25 : vector<8x128xf32>
    %28 = arith.addf %22, %27 : vector<8x128xf32>
    %c4 = arith.constant 4 : index
    %c0_9 = arith.constant 0 : index
    %29 = memref.load %arg1[%c4, %c0_9] : memref<6x3xf32, #tpu.memory_space<smem>>
    %30 = vector.extract_strided_slice %0 {offsets = [4, 0, 0], sizes = [1, 8, 128], strides = [1, 1, 1]} : vector<6x8x128xf32> to vector<1x8x128xf32>
    %31 = vector.shape_cast %30 : vector<1x8x128xf32> to vector<8x128xf32>
    %32 = vector.broadcast %29 : f32 to vector<8x128xf32>
    %33 = arith.mulf %32, %31 : vector<8x128xf32>
    %34 = arith.addf %28, %33 : vector<8x128xf32>
    %c5 = arith.constant 5 : index
    %c0_10 = arith.constant 0 : index
    %35 = memref.load %arg1[%c5, %c0_10] : memref<6x3xf32, #tpu.memory_space<smem>>
    %36 = vector.extract_strided_slice %0 {offsets = [5, 0, 0], sizes = [1, 8, 128], strides = [1, 1, 1]} : vector<6x8x128xf32> to vector<1x8x128xf32>
    %37 = vector.shape_cast %36 : vector<1x8x128xf32> to vector<8x128xf32>
    %38 = vector.broadcast %35 : f32 to vector<8x128xf32>
    %39 = arith.mulf %38, %37 : vector<8x128xf32>
    %40 = arith.addf %34, %39 : vector<8x128xf32>
    %cst = arith.constant 0.000000e+00 : f32
    %41 = vector.broadcast %cst : f32 to vector<8x128xf32>
    %42 = arith.maximumf %40, %41 : vector<8x128xf32>
    %c0_11 = arith.constant 0 : index
    %c0_12 = arith.constant 0 : index
    %43 = memref.load %arg3[%c0_11, %c0_12] : memref<3x1xf32, #tpu.memory_space<smem>>
    %44 = vector.broadcast %43 : f32 to vector<8x128xf32>
    %45 = arith.mulf %44, %42 : vector<8x128xf32>
    %46 = arith.addf %2, %45 : vector<8x128xf32>
    %c1_13 = arith.constant 1 : index
    %47 = memref.load %arg2[%c1_13] : memref<3xf32, #tpu.memory_space<smem>>
    %48 = vector.broadcast %47 : f32 to vector<8x128xf32>
    %c0_14 = arith.constant 0 : index
    %c1_15 = arith.constant 1 : index
    %49 = memref.load %arg1[%c0_14, %c1_15] : memref<6x3xf32, #tpu.memory_space<smem>>
    %50 = vector.extract_strided_slice %0 {offsets = [0, 0, 0], sizes = [1, 8, 128], strides = [1, 1, 1]} : vector<6x8x128xf32> to vector<1x8x128xf32>
    %51 = vector.shape_cast %50 : vector<1x8x128xf32> to vector<8x128xf32>
    %52 = vector.broadcast %49 : f32 to vector<8x128xf32>
    %53 = arith.mulf %52, %51 : vector<8x128xf32>
    %54 = arith.addf %48, %53 : vector<8x128xf32>
    %c1_16 = arith.constant 1 : index
    %c1_17 = arith.constant 1 : index
    %55 = memref.load %arg1[%c1_16, %c1_17] : memref<6x3xf32, #tpu.memory_space<smem>>
    %56 = vector.extract_strided_slice %0 {offsets = [1, 0, 0], sizes = [1, 8, 128], strides = [1, 1, 1]} : vector<6x8x128xf32> to vector<1x8x128xf32>
    %57 = vector.shape_cast %56 : vector<1x8x128xf32> to vector<8x128xf32>
    %58 = vector.broadcast %55 : f32 to vector<8x128xf32>
    %59 = arith.mulf %58, %57 : vector<8x128xf32>
    %60 = arith.addf %54, %59 : vector<8x128xf32>
    %c2_18 = arith.constant 2 : index
    %c1_19 = arith.constant 1 : index
    %61 = memref.load %arg1[%c2_18, %c1_19] : memref<6x3xf32, #tpu.memory_space<smem>>
    %62 = vector.extract_strided_slice %0 {offsets = [2, 0, 0], sizes = [1, 8, 128], strides = [1, 1, 1]} : vector<6x8x128xf32> to vector<1x8x128xf32>
    %63 = vector.shape_cast %62 : vector<1x8x128xf32> to vector<8x128xf32>
    %64 = vector.broadcast %61 : f32 to vector<8x128xf32>
    %65 = arith.mulf %64, %63 : vector<8x128xf32>
    %66 = arith.addf %60, %65 : vector<8x128xf32>
    %c3_20 = arith.constant 3 : index
    %c1_21 = arith.constant 1 : index
    %67 = memref.load %arg1[%c3_20, %c1_21] : memref<6x3xf32, #tpu.memory_space<smem>>
    %68 = vector.extract_strided_slice %0 {offsets = [3, 0, 0], sizes = [1, 8, 128], strides = [1, 1, 1]} : vector<6x8x128xf32> to vector<1x8x128xf32>
    %69 = vector.shape_cast %68 : vector<1x8x128xf32> to vector<8x128xf32>
    %70 = vector.broadcast %67 : f32 to vector<8x128xf32>
    %71 = arith.mulf %70, %69 : vector<8x128xf32>
    %72 = arith.addf %66, %71 : vector<8x128xf32>
    %c4_22 = arith.constant 4 : index
    %c1_23 = arith.constant 1 : index
    %73 = memref.load %arg1[%c4_22, %c1_23] : memref<6x3xf32, #tpu.memory_space<smem>>
    %74 = vector.extract_strided_slice %0 {offsets = [4, 0, 0], sizes = [1, 8, 128], strides = [1, 1, 1]} : vector<6x8x128xf32> to vector<1x8x128xf32>
    %75 = vector.shape_cast %74 : vector<1x8x128xf32> to vector<8x128xf32>
    %76 = vector.broadcast %73 : f32 to vector<8x128xf32>
    %77 = arith.mulf %76, %75 : vector<8x128xf32>
    %78 = arith.addf %72, %77 : vector<8x128xf32>
    %c5_24 = arith.constant 5 : index
    %c1_25 = arith.constant 1 : index
    %79 = memref.load %arg1[%c5_24, %c1_25] : memref<6x3xf32, #tpu.memory_space<smem>>
    %80 = vector.extract_strided_slice %0 {offsets = [5, 0, 0], sizes = [1, 8, 128], strides = [1, 1, 1]} : vector<6x8x128xf32> to vector<1x8x128xf32>
    %81 = vector.shape_cast %80 : vector<1x8x128xf32> to vector<8x128xf32>
    %82 = vector.broadcast %79 : f32 to vector<8x128xf32>
    %83 = arith.mulf %82, %81 : vector<8x128xf32>
    %84 = arith.addf %78, %83 : vector<8x128xf32>
    %cst_26 = arith.constant 0.000000e+00 : f32
    %85 = vector.broadcast %cst_26 : f32 to vector<8x128xf32>
    %86 = arith.maximumf %84, %85 : vector<8x128xf32>
    %c1_27 = arith.constant 1 : index
    %c0_28 = arith.constant 0 : index
    %87 = memref.load %arg3[%c1_27, %c0_28] : memref<3x1xf32, #tpu.memory_space<smem>>
    %88 = vector.broadcast %87 : f32 to vector<8x128xf32>
    %89 = arith.mulf %88, %86 : vector<8x128xf32>
    %90 = arith.addf %46, %89 : vector<8x128xf32>
    %c2_29 = arith.constant 2 : index
    %91 = memref.load %arg2[%c2_29] : memref<3xf32, #tpu.memory_space<smem>>
    %92 = vector.broadcast %91 : f32 to vector<8x128xf32>
    %c0_30 = arith.constant 0 : index
    %c2_31 = arith.constant 2 : index
    %93 = memref.load %arg1[%c0_30, %c2_31] : memref<6x3xf32, #tpu.memory_space<smem>>
    %94 = vector.extract_strided_slice %0 {offsets = [0, 0, 0], sizes = [1, 8, 128], strides = [1, 1, 1]} : vector<6x8x128xf32> to vector<1x8x128xf32>
    %95 = vector.shape_cast %94 : vector<1x8x128xf32> to vector<8x128xf32>
    %96 = vector.broadcast %93 : f32 to vector<8x128xf32>
    %97 = arith.mulf %96, %95 : vector<8x128xf32>
    %98 = arith.addf %92, %97 : vector<8x128xf32>
    %c1_32 = arith.constant 1 : index
    %c2_33 = arith.constant 2 : index
    %99 = memref.load %arg1[%c1_32, %c2_33] : memref<6x3xf32, #tpu.memory_space<smem>>
    %100 = vector.extract_strided_slice %0 {offsets = [1, 0, 0], sizes = [1, 8, 128], strides = [1, 1, 1]} : vector<6x8x128xf32> to vector<1x8x128xf32>
    %101 = vector.shape_cast %100 : vector<1x8x128xf32> to vector<8x128xf32>
    %102 = vector.broadcast %99 : f32 to vector<8x128xf32>
    %103 = arith.mulf %102, %101 : vector<8x128xf32>
    %104 = arith.addf %98, %103 : vector<8x128xf32>
    %c2_34 = arith.constant 2 : index
    %c2_35 = arith.constant 2 : index
    %105 = memref.load %arg1[%c2_34, %c2_35] : memref<6x3xf32, #tpu.memory_space<smem>>
    %106 = vector.extract_strided_slice %0 {offsets = [2, 0, 0], sizes = [1, 8, 128], strides = [1, 1, 1]} : vector<6x8x128xf32> to vector<1x8x128xf32>
    %107 = vector.shape_cast %106 : vector<1x8x128xf32> to vector<8x128xf32>
    %108 = vector.broadcast %105 : f32 to vector<8x128xf32>
    %109 = arith.mulf %108, %107 : vector<8x128xf32>
    %110 = arith.addf %104, %109 : vector<8x128xf32>
    %c3_36 = arith.constant 3 : index
    %c2_37 = arith.constant 2 : index
    %111 = memref.load %arg1[%c3_36, %c2_37] : memref<6x3xf32, #tpu.memory_space<smem>>
    %112 = vector.extract_strided_slice %0 {offsets = [3, 0, 0], sizes = [1, 8, 128], strides = [1, 1, 1]} : vector<6x8x128xf32> to vector<1x8x128xf32>
    %113 = vector.shape_cast %112 : vector<1x8x128xf32> to vector<8x128xf32>
    %114 = vector.broadcast %111 : f32 to vector<8x128xf32>
    %115 = arith.mulf %114, %113 : vector<8x128xf32>
    %116 = arith.addf %110, %115 : vector<8x128xf32>
    %c4_38 = arith.constant 4 : index
    %c2_39 = arith.constant 2 : index
    %117 = memref.load %arg1[%c4_38, %c2_39] : memref<6x3xf32, #tpu.memory_space<smem>>
    %118 = vector.extract_strided_slice %0 {offsets = [4, 0, 0], sizes = [1, 8, 128], strides = [1, 1, 1]} : vector<6x8x128xf32> to vector<1x8x128xf32>
    %119 = vector.shape_cast %118 : vector<1x8x128xf32> to vector<8x128xf32>
    %120 = vector.broadcast %117 : f32 to vector<8x128xf32>
    %121 = arith.mulf %120, %119 : vector<8x128xf32>
    %122 = arith.addf %116, %121 : vector<8x128xf32>
    %c5_40 = arith.constant 5 : index
    %c2_41 = arith.constant 2 : index
    %123 = memref.load %arg1[%c5_40, %c2_41] : memref<6x3xf32, #tpu.memory_space<smem>>
    %124 = vector.extract_strided_slice %0 {offsets = [5, 0, 0], sizes = [1, 8, 128], strides = [1, 1, 1]} : vector<6x8x128xf32> to vector<1x8x128xf32>
    %125 = vector.shape_cast %124 : vector<1x8x128xf32> to vector<8x128xf32>
    %126 = vector.broadcast %123 : f32 to vector<8x128xf32>
    %127 = arith.mulf %126, %125 : vector<8x128xf32>
    %128 = arith.addf %122, %127 : vector<8x128xf32>
    %cst_42 = arith.constant 0.000000e+00 : f32
    %129 = vector.broadcast %cst_42 : f32 to vector<8x128xf32>
    %130 = arith.maximumf %128, %129 : vector<8x128xf32>
    %c2_43 = arith.constant 2 : index
    %c0_44 = arith.constant 0 : index
    %131 = memref.load %arg3[%c2_43, %c0_44] : memref<3x1xf32, #tpu.memory_space<smem>>
    %132 = vector.broadcast %131 : f32 to vector<8x128xf32>
    %133 = arith.mulf %132, %130 : vector<8x128xf32>
    %134 = arith.addf %90, %133 : vector<8x128xf32>
    %c0_45 = arith.constant 0 : index
    %c0_46 = arith.constant 0 : index
    %135 = vector.load %arg6[%c0_45, %c0_46] : memref<8x128xf32, #tpu.memory_space<vmem>>, vector<8x128xf32>
    tpu.vector_store %arg6[%c0_45, %c0_46], %134 {strides = array<i32>} : memref<8x128xf32, #tpu.memory_space<vmem>>, vector<8x128xf32>,
    return
  }
  func.func @transform_0(%arg0: i32) -> (i32, i32) {
    %c0_i32 = arith.constant 0 : i32
    %c0_i32_0 = arith.constant 0 : i32
    %c0_i32_1 = arith.constant 0 : i32
    return %c0_i32, %c0_i32_0 : i32, i32
  }
  func.func @transform_1(%arg0: i32) -> i32 {
    %c0_i32 = arith.constant 0 : i32
    %c0_i32_0 = arith.constant 0 : i32
    return %c0_i32 : i32
  }
  func.func @transform_2(%arg0: i32) -> (i32, i32) {
    %c0_i32 = arith.constant 0 : i32
    %c0_i32_0 = arith.constant 0 : i32
    %c0_i32_1 = arith.constant 0 : i32
    return %c0_i32, %c0_i32_0 : i32, i32
  }
  func.func @transform_3(%arg0: i32) -> i32 {
    %c0_i32 = arith.constant 0 : i32
    %c0_i32_0 = arith.constant 0 : i32
    return %c0_i32 : i32
  }
  func.func @transform_4(%arg0: i32) -> (i32, i32, i32) {
    %c0_i32 = arith.constant 0 : i32
    %c0_i32_0 = arith.constant 0 : i32
    %c0_i32_1 = arith.constant 0 : i32
    return %c0_i32, %arg0, %c0_i32_0 : i32, i32, i32
  }
  func.func @transform_5(%arg0: i32) -> (i32, i32) {
    %c0_i32 = arith.constant 0 : i32
    %c0_i32_0 = arith.constant 0 : i32
    return %arg0, %c0_i32 : i32, i32
  }
}

</mosaic_0001>

<llo_original>
// kernel: tpu_custom_call.1
$region0: #{tpu_custom_call.1}
  #allocation0 [shape = 'u32[]', space=smem, size = 0x4, offset = 0x4, fixed_abs, tag = 'smem constant byte address 0x4 - core index']
  #allocation1 [shape = 'u32[144,128]{1,0:T(1,128)}', space=vmem, size = 0x12000, scoped, tag = 'internal scratch']
  #allocation2 [shape = 'f32[1]{0:T(128)S(6)}', space=smem, size = 0x200, scoped, tag = 'scoped memory for tpu_custom_call.1']
  %s0 = inlined_call_operand.vmem [shape: f32[6,3], index: 0, kind: input, shape index: {}]
  %s1 = inlined_call_operand.vmem [shape: f32[3], index: 1, kind: input, shape index: {}]
  %s2 = inlined_call_operand.vmem [shape: f32[3,1], index: 2, kind: input, shape index: {}]
  %s3 = inlined_call_operand.<no memory space> [shape: f32[1], index: 3, kind: input, shape index: {}]
  %s4 = inlined_call_operand.hbm [shape: f32[6,8,128], index: 4, kind: input, shape index: {}]
  %s5 = inlined_call_operand.hbm [shape: f32[8,128], index: 5, kind: output, shape index: {}]
  %s6 = sld [smem:[#allocation0]]
  $region46: #{tpu_custom_call.1} parent=0
    _
  %s8 = ssub.s32 1, %s6
  %s9 = scalar_select 0, %s8, %s6
  %10 = sst [smem:[#allocation2]] %s3
  $region1: #{tpu_custom_call.1} parent=0
    #allocation3 [shape = 'u8[4096]{0}', space=smem, size = 0x1000, scoped, tag = 'input window, operand 0, single buffered']
    #allocation4 [shape = 's32[1]{0}', space=sflag, size = 0x4, scoped, tag = 'scoped memory for tpu_custom_call.1']
    #allocation5 [shape = 's32[1]{0}', space=sflag, size = 0x4, scoped, tag = 'scoped memory for tpu_custom_call.1']
    #allocation6 [shape = 's32[1]{0}', space=sflag, size = 0x4, scoped, tag = 'scoped memory for tpu_custom_call.1']
    #allocation7 [shape = 'u8[512]{0}', space=smem, size = 0x200, scoped, tag = 'input window, operand 1, single buffered']
    #allocation8 [shape = 's32[1]{0}', space=sflag, size = 0x4, scoped, tag = 'scoped memory for tpu_custom_call.1']
    #allocation9 [shape = 'u8[2048]{0}', space=smem, size = 0x800, scoped, tag = 'input window, operand 2, single buffered']
    #allocation10 [shape = 'u8[24576]{0}', space=vmem, size = 0x6000, scoped, tag = 'input window, operand 4, single buffered']
    #allocation11 [shape = 'u8[4096]{0}', space=vmem, size = 0x1000, scoped, tag = 'output window, operand 0, single buffered']
    %11 = vsyncpa [#allocation6], 0
    %12 = vsyncpa [#allocation8], 0
    %13 = vsyncpa [#allocation4], 0
    %14 = vsyncpa [#allocation5], 0
    // Predicated region
    $region2: #{tpu_custom_call.1} parent=1 // pred_check
      _
    $region3: #{tpu_custom_call.1} parent=1 // pred_check_branch
      %16 = sbr.rel (0) target = $region5
    $region4: #{tpu_custom_call.1} parent=1 // pred_region
      %s18 = ssub.s32 128, 128
      %19 = vsyncadd [#allocation6], %s18
      %s21 = sshll.u32 %s0, 4
      %s22 = int_to_ptr.vmem [resolvable:$true] %s21
      %24 = dma.vmem_to_smem %s22, 128, [#allocation3], [#allocation6]
    $region5: #{tpu_custom_call.1} parent=1 // pred_fallthru
      _
    // Predicated region
    $region6: #{tpu_custom_call.1} parent=1 // pred_check
      _
    $region7: #{tpu_custom_call.1} parent=1 // pred_check_branch
      %26 = sbr.rel (0) target = $region9
    $region8: #{tpu_custom_call.1} parent=1 // pred_region
      %s28 = ssub.s32 16, 16
      %29 = vsyncadd [#allocation8], %s28
      %s31 = sshll.u32 %s1, 4
      %s32 = int_to_ptr.vmem [resolvable:$true] %s31
      %34 = dma.vmem_to_smem %s32, 16, [#allocation7], [#allocation8]
    $region9: #{tpu_custom_call.1} parent=1 // pred_fallthru
      _
    // Predicated region
    $region10: #{tpu_custom_call.1} parent=1 // pred_check
      _
    $region11: #{tpu_custom_call.1} parent=1 // pred_check_branch
      %36 = sbr.rel (0) target = $region13
    $region12: #{tpu_custom_call.1} parent=1 // pred_region
      %s38 = ssub.s32 64, 64
      %39 = vsyncadd [#allocation8], %s38
      %s41 = sshll.u32 %s2, 4
      %s42 = int_to_ptr.vmem [resolvable:$true] %s41
      %44 = dma.vmem_to_smem %s42, 64, [#allocation9], [#allocation8]
    $region13: #{tpu_custom_call.1} parent=1 // pred_fallthru
      _
    // Predicated region
    $region14: #{tpu_custom_call.1} parent=1 // pred_check
      _
    $region15: #{tpu_custom_call.1} parent=1 // pred_check_branch
      %46 = sbr.rel (0) target = $region17
    $region16: #{tpu_custom_call.1} parent=1 // pred_region
      _
    $region17: #{tpu_custom_call.1} parent=1 // pred_fallthru
      _
    // Predicated region
    $region18: #{tpu_custom_call.1} parent=1 // pred_check
      _
    $region19: #{tpu_custom_call.1} parent=1 // pred_check_branch
      %48 = sbr.rel (0) target = $region21
    $region20: #{tpu_custom_call.1} parent=1 // pred_region
      %s50 = ssub.s32 768, 768
      %51 = vsyncadd [#allocation4], %s50
      %s52 = sshll.u32 [#allocation10], 4
      %s53 = int_to_ptr.vmem [resolvable:$true] %s52
      %58 = dma.hbm_to_vmem [thread:$0]  %s4, 768, %s53, [#allocation4], 128, 128, 8
    $region21: #{tpu_custom_call.1} parent=1 // pred_fallthru
      _
    // Predicated region
    $region22: #{tpu_custom_call.1} parent=1 // pred_check
      _
    $region23: #{tpu_custom_call.1} parent=1 // pred_check_branch
      %60 = sbr.rel (0) target = $region25
    $region24: #{tpu_custom_call.1} parent=1 // pred_region
      %61 = dma.done [#allocation6], 128
    $region25: #{tpu_custom_call.1} parent=1 // pred_fallthru
      _
    // Predicated region
    $region26: #{tpu_custom_call.1} parent=1 // pred_check
      _
    $region27: #{tpu_custom_call.1} parent=1 // pred_check_branch
      %63 = sbr.rel (0) target = $region29
    $region28: #{tpu_custom_call.1} parent=1 // pred_region
      %64 = dma.done [#allocation8], 16
    $region29: #{tpu_custom_call.1} parent=1 // pred_fallthru
      _
    // Predicated region
    $region30: #{tpu_custom_call.1} parent=1 // pred_check
      _
    $region31: #{tpu_custom_call.1} parent=1 // pred_check_branch
      %66 = sbr.rel (0) target = $region33
    $region32: #{tpu_custom_call.1} parent=1 // pred_region
      %67 = dma.done [#allocation8], 64
    $region33: #{tpu_custom_call.1} parent=1 // pred_fallthru
      _
    // Predicated region
    $region34: #{tpu_custom_call.1} parent=1 // pred_check
      _
    $region35: #{tpu_custom_call.1} parent=1 // pred_check_branch
      %69 = sbr.rel (0) target = $region37
    $region36: #{tpu_custom_call.1} parent=1 // pred_region
      %70 = dma.done [#allocation4], 768
    $region37: #{tpu_custom_call.1} parent=1 // pred_fallthru
      _
    %71 = sfence
    %v72 = vld [vmem:[#allocation10] sm:$0xff]
    %v73 = vld [vmem:[#allocation10 + $0x8] sm:$0xff]
    %v74 = vld [vmem:[#allocation10 + $0x10] sm:$0xff]
    %v75 = vld [vmem:[#allocation10 + $0x18] sm:$0xff]
    %v76 = vld [vmem:[#allocation10 + $0x20] sm:$0xff]
    %v77 = vld [vmem:[#allocation10 + $0x28] sm:$0xff]
    %s78 = sld [smem:[#allocation2]]
    %v79 = vstv %s78
    %s80 = sld [smem:[#allocation7]]
    %v81 = vstv %s80
    %s82 = sld [smem:[#allocation3]]
    %v83 = vstv %s82
    %v84 = vmul.f32 %v83, %v72
    %v85 = vadd.f32 %v81, %v84
    %s86 = sld [smem:[#allocation3 + $0x80]]
    %v87 = vstv %s86
    %v88 = vmul.f32 %v87, %v73
    %v89 = vadd.f32 %v85, %v88
    %s90 = sld [smem:[#allocation3 + $0x100]]
    %v91 = vstv %s90
    %v92 = vmul.f32 %v91, %v74
    %v93 = vadd.f32 %v89, %v92
    %s94 = sld [smem:[#allocation3 + $0x180]]
    %v95 = vstv %s94
    %v96 = vmul.f32 %v95, %v75
    %v97 = vadd.f32 %v93, %v96
    %s98 = sld [smem:[#allocation3 + $0x200]]
    %v99 = vstv %s98
    %v100 = vmul.f32 %v99, %v76
    %v101 = vadd.f32 %v97, %v100
    %s102 = sld [smem:[#allocation3 + $0x280]]
    %v103 = vstv %s102
    %v104 = vmul.f32 %v103, %v77
    %v105 = vadd.f32 %v101, %v104
    %v106 = vmax.f32 %v105, 0.0
    %s107 = sld [smem:[#allocation9]]
    %v108 = vstv %s107
    %v109 = vmul.f32 %v108, %v106
    %v110 = vadd.f32 %v79, %v109
    %s111 = sld [smem:[#allocation7 + $0x1]]
    %v112 = vstv %s111
    %s113 = sld [smem:[#allocation3 + $0x1]]
    %v114 = vstv %s113
    %v115 = vmul.f32 %v114, %v72
    %v116 = vadd.f32 %v112, %v115
    %s117 = sld [smem:[#allocation3 + $0x81]]
    %v118 = vstv %s117
    %v119 = vmul.f32 %v118, %v73
    %v120 = vadd.f32 %v116, %v119
    %s121 = sld [smem:[#allocation3 + $0x101]]
    %v122 = vstv %s121
    %v123 = vmul.f32 %v122, %v74
    %v124 = vadd.f32 %v120, %v123
    %s125 = sld [smem:[#allocation3 + $0x181]]
    %v126 = vstv %s125
    %v127 = vmul.f32 %v126, %v75
    %v128 = vadd.f32 %v124, %v127
    %s129 = sld [smem:[#allocation3 + $0x201]]
    %v130 = vstv %s129
    %v131 = vmul.f32 %v130, %v76
    %v132 = vadd.f32 %v128, %v131
    %s133 = sld [smem:[#allocation3 + $0x281]]
    %v134 = vstv %s133
    %v135 = vmul.f32 %v134, %v77
    %v136 = vadd.f32 %v132, %v135
    %v137 = vmax.f32 %v136, 0.0
    %s138 = sld [smem:[#allocation9 + $0x80]]
    %v139 = vstv %s138
    %v140 = vmul.f32 %v139, %v137
    %v141 = vadd.f32 %v110, %v140
    %s142 = sld [smem:[#allocation7 + $0x2]]
    %v143 = vstv %s142
    %s144 = sld [smem:[#allocation3 + $0x2]]
    %v145 = vstv %s144
    %v146 = vmul.f32 %v145, %v72
    %v147 = vadd.f32 %v143, %v146
    %s148 = sld [smem:[#allocation3 + $0x82]]
    %v149 = vstv %s148
    %v150 = vmul.f32 %v149, %v73
    %v151 = vadd.f32 %v147, %v150
    %s152 = sld [smem:[#allocation3 + $0x102]]
    %v153 = vstv %s152
    %v154 = vmul.f32 %v153, %v74
    %v155 = vadd.f32 %v151, %v154
    %s156 = sld [smem:[#allocation3 + $0x182]]
    %v157 = vstv %s156
    %v158 = vmul.f32 %v157, %v75
    %v159 = vadd.f32 %v155, %v158
    %s160 = sld [smem:[#allocation3 + $0x202]]
    %v161 = vstv %s160
    %v162 = vmul.f32 %v161, %v76
    %v163 = vadd.f32 %v159, %v162
    %s164 = sld [smem:[#allocation3 + $0x282]]
    %v165 = vstv %s164
    %v166 = vmul.f32 %v165, %v77
    %v167 = vadd.f32 %v163, %v166
    %v168 = vmax.f32 %v167, 0.0
    %s169 = sld [smem:[#allocation9 + $0x100]]
    %v170 = vstv %s169
    %v171 = vmul.f32 %v170, %v168
    %v172 = vadd.f32 %v141, %v171
    %173 = vst [vmem:[#allocation11] sm:$0xff] %v172
    // Predicated region
    $region38: #{tpu_custom_call.1} parent=1 // pred_check
      _
    $region39: #{tpu_custom_call.1} parent=1 // pred_check_branch
      %175 = sbr.rel (0) target = $region41
    $region40: #{tpu_custom_call.1} parent=1 // pred_region
      %s177 = ssub.s32 128, 128
      %178 = vsyncadd [#allocation5], %s177
      %s180 = sshll.u32 [#allocation11], 4
      %s181 = int_to_ptr.vmem [resolvable:$true] %s180
      %183 = dma.vmem_to_hbm [thread:$0]  %s181, 128, %s5, [#allocation5]
    $region41: #{tpu_custom_call.1} parent=1 // pred_fallthru
      _
    // Predicated region
    $region42: #{tpu_custom_call.1} parent=1 // pred_check
      _
    $region43: #{tpu_custom_call.1} parent=1 // pred_check_branch
      %185 = sbr.rel (0) target = $region45
    $region44: #{tpu_custom_call.1} parent=1 // pred_region
      %186 = dma.done [#allocation5], 128
    $region45: #{tpu_custom_call.1} parent=1 // pred_fallthru
      _
    %187 = vsyncpa [#allocation4], 1
    %188 = vsyncpa [#allocation5], 1
    %189 = vsyncpa [#allocation6], 1
    %190 = vsyncpa [#allocation8], 1

</llo_original>
